<compile_context>
chip_gen: v5e
topology: v5e:2x2
jax: 0.10.0
libtpu: 0.0.40
codegen_flags: <defaults>
</compile_context>

<pallas_src>
import jax
import jax.numpy as jnp
from jax.experimental import pallas as pl
from jax.experimental.pallas import tpu as pltpu


def _round_up(x, m):
    return ((x + m - 1) // m) * m


def _tpu_kind():
    try:
        return jax.devices()[0].device_kind.lower()
    except Exception:
        return ""


def _default_epilogue_dtype(kind=None):
    kind = _tpu_kind() if kind is None else kind
    # bf16 VALU exists on v6e / v7x; v5e (and unknown chips) keep f32.
    return (jnp.bfloat16 if any(t in kind for t in ("v6", "v7", "7x"))
            else jnp.float32)


def _choose_tiling(B, tile_b, min_steps=1):
    """Pick (tile rows, padded batch rows).

    Batch is padded to 128-row granularity so the lane-dense (rows//128, 128)
    output slab is exact.  Multi-tile runs use tiles that are a multiple of
    1024 rows so the per-tile output block (tb//128, 128) keeps a
    sublane-aligned (multiple-of-8) second-minor dim.
    """
    b128 = _round_up(B, 128)
    n = pl.cdiv(b128, tile_b)
    if min_steps > n and b128 >= min_steps * 1024:
        n = min_steps            # e.g. engage both v7x TensorCores
    if n == 1:
        return b128, b128        # single tile: block == full array dims
    tb = _round_up(pl.cdiv(b128, n), 1024)
    return tb, n * tb


def critic_kernel(x_ref, w1_ref, b1_ref, w2_ref, b2_ref, w3_ref, b3_ref,
                  o_ref):
    epi = b1_ref.dtype  # f32 on v5e, bf16 on v6e/v7x

    # ---- Layer 1: relu([s||a] @ W1 + b1) --- bf16 MXU inputs, f32 acc -----
    h1 = jnp.dot(x_ref[...], w1_ref[...], preferred_element_type=jnp.float32)
    h1 = jnp.maximum(h1.astype(epi) + b1_ref[...], 0)            # (tb, 64)

    # ---- Layer 2: relu(h1 @ W2 + b2) ---------------------------------------
    h2 = jnp.dot(h1.astype(w2_ref.dtype), w2_ref[...],
                 preferred_element_type=jnp.float32)
    h2 = jnp.maximum(h2.astype(epi) + b2_ref[...], 0)            # (tb, 64)

    # ---- Layer 3 (64 -> 1) on VPU/XLU: lane multiply + cross-lane reduce ---
    hw = h2.astype(jnp.float32) * w3_ref[...]                    # (tb, 64) f32
    # Lane-dense output: fold the per-row scalar into a (tb//128, 128) slab
    # (row-major) so the store is an unmasked full-lane vst.
    n_rows, n_lanes = o_ref.shape
    q = jnp.sum(hw.reshape(n_rows, n_lanes, hw.shape[-1]), axis=-1)
    o_ref[...] = (q + b3_ref[0, 0]).astype(o_ref.dtype)


def critic_forward(s, a, params, *, tile_b=4096, epilogue_dtype=None,
                   min_grid_steps=None):
    """s: (B, state_dim), a: (B, action_dim) -> q: (B, 1) float32."""
    w1, b1, w2, b2, w3, b3 = params
    B, ds = s.shape
    da = a.shape[1]
    d_in = ds + da
    assert w1.shape == (d_in, 64)

    kind = _tpu_kind()
    if epilogue_dtype is None:
        epilogue_dtype = _default_epilogue_dtype(kind)
    if min_grid_steps is None:
        # v7x megacore: need >= 2 grid steps for both TensorCores to work.
        min_grid_steps = 2 if any(t in kind for t in ("v7", "7x")) else 1

    # Fuse torch.cat([s, a], 1): pack once in the wrapper (one fused XLA op,
    # one DMA stream, one resident W1) and round MXU inputs to bf16.
    x = jnp.concatenate([s, a], axis=1).astype(w1.dtype)

    tb, b_pad = _choose_tiling(B, tile_b, min_grid_steps)
    if b_pad != B:
        # Padded rows are computed and discarded (sliced off below).
        x = jnp.pad(x, ((0, b_pad - B), (0, 0)))
    n_tiles = b_pad // tb

    b1c = b1.astype(epilogue_dtype)
    b2c = b2.astype(epilogue_dtype)

    def resident(arr):  # same block every grid step -> stays VMEM-resident
        return pl.BlockSpec(arr.shape, lambda i: (0, 0))

    q_slab = pl.pallas_call(
        critic_kernel,
        out_shape=jax.ShapeDtypeStruct((b_pad // 128, 128), jnp.float32),
        grid=(n_tiles,),
        in_specs=[
            pl.BlockSpec((tb, d_in), lambda i: (i, 0)),  # packed [s||a] tile
            resident(w1),                                # (d_in, 64) bf16
            resident(b1c),                               # (1, 64)
            resident(w2),                                # (64, 64)   bf16
            resident(b2c),                               # (1, 64)
            resident(w3),                                # (1, 64)    f32
            pl.BlockSpec(memory_space=pltpu.SMEM),       # b3 scalar  f32
        ],
        # Lane-dense output slab (tb//128, 128) per batch tile.
        out_specs=pl.BlockSpec((tb // 128, 128), lambda i: (i, 0)),
        compiler_params=pltpu.CompilerParams(
            dimension_semantics=("parallel",)),          # megacore on v7x
    )(x, w1, b1c, w2, b2c, w3, b3)

    return q_slab.reshape(b_pad, 1)[:B]


def init_critic_params(key, state_dim, action_dim, mxu_dtype=jnp.bfloat16):
    """nn.Linear-default init: U(-1/sqrt(fan_in), 1/sqrt(fan_in)).
    Weights are stored (in_features, out_features) -> kernel does x @ W + b."""
    def uniform(k, shape, fan_in):
        bound = fan_in ** -0.5
        return jax.random.uniform(k, shape, jnp.float32, -bound, bound)

    k1w, k1b, k2w, k2b, k3w, k3b = jax.random.split(key, 6)
    d_in = state_dim + action_dim
    w1 = uniform(k1w, (d_in, 64), d_in).astype(mxu_dtype)
    b1 = uniform(k1b, (1, 64), d_in)
    w2 = uniform(k2w, (64, 64), 64).astype(mxu_dtype)
    b2 = uniform(k2b, (1, 64), 64)
    w3 = uniform(k3w, (1, 64), 64)      # row form of the (64, 1) head
    b3 = uniform(k3b, (1, 1), 64)
    return (w1, b1, w2, b2, w3, b3)


def critic_reference(s, a, params, epilogue_dtype=jnp.float32):
    """Pure-JAX reference emulating the kernel's dtype handling."""
    w1, b1, w2, b2, w3, b3 = params
    f32 = jnp.float32
    hi = jax.lax.Precision.HIGHEST
    x = jnp.concatenate([s, a], axis=1).astype(w1.dtype).astype(f32)
    h1 = jnp.dot(x, w1.astype(f32), precision=hi)
    h1 = jnp.maximum(h1.astype(epilogue_dtype) + b1.astype(epilogue_dtype), 0)
    h2 = jnp.dot(h1.astype(w2.dtype).astype(f32), w2.astype(f32), precision=hi)
    h2 = jnp.maximum(h2.astype(epilogue_dtype) + b2.astype(epilogue_dtype), 0)
    return jnp.sum(h2.astype(f32) * w3, axis=-1, keepdims=True) + b3[0, 0]


if __name__ == "__main__":
    key = jax.random.PRNGKey(0)
    k_params, k_s, k_a = jax.random.split(key, 3)

    batch, state_dim, action_dim = 4, 16, 8
    params = init_critic_params(k_params, state_dim, action_dim)
    s = jax.random.normal(k_s, (batch, state_dim), jnp.float32)
    a = jax.random.normal(k_a, (batch, action_dim), jnp.float32)

    q = critic_forward(s, a, params)
    jax.block_until_ready(q)

    ref = critic_reference(s, a, params, _default_epilogue_dtype())

    assert q.shape == (batch, 1), q.shape
    max_err = float(jnp.max(jnp.abs(q - ref)))
    assert jnp.allclose(q, ref, atol=3e-2, rtol=3e-2), max_err

    print("KERNEL_OK")
</pallas_src>

<mosaic_0001>
module attributes {stable_mosaic.version = 11 : i64} {
  func.func @critic_kernel(%arg0: i32, %arg1: memref<128x24xbf16, #tpu.memory_space<vmem>>, %arg2: memref<24x64xbf16, #tpu.memory_space<vmem>>, %arg3: memref<1x64xf32, #tpu.memory_space<vmem>>, %arg4: memref<64x64xbf16, #tpu.memory_space<vmem>>, %arg5: memref<1x64xf32, #tpu.memory_space<vmem>>, %arg6: memref<1x64xf32, #tpu.memory_space<vmem>>, %arg7: memref<1x1xf32, #tpu.memory_space<smem>>, %arg8: memref<1x128xf32, #tpu.memory_space<vmem>>) attributes {dimension_semantics = [#tpu.dimension_semantics<parallel>], iteration_bounds = array<i64: 1>, scalar_prefetch = 0 : i64, scratch_operands = 0 : i64, tpu.core_type = #tpu.core_type<tc>, window_params = [{transform_indices = @transform_0, window_bounds = array<i64: 128, 24>}, {pipeline_mode = #tpu.pipeline_mode<synchronous>, transform_indices = @transform_1, window_bounds = array<i64: 24, 64>}, {pipeline_mode = #tpu.pipeline_mode<synchronous>, transform_indices = @transform_2, window_bounds = array<i64: 1, 64>}, {pipeline_mode = #tpu.pipeline_mode<synchronous>, transform_indices = @transform_3, window_bounds = array<i64: 64, 64>}, {pipeline_mode = #tpu.pipeline_mode<synchronous>, transform_indices = @transform_4, window_bounds = array<i64: 1, 64>}, {pipeline_mode = #tpu.pipeline_mode<synchronous>, transform_indices = @transform_5, window_bounds = array<i64: 1, 64>}, {transform_indices = @transform_6, window_bounds = array<i64: 1, 1>}, {transform_indices = @transform_7, window_bounds = array<i64: 1, 128>}]} {
    %c0 = arith.constant 0 : index
    %c0_0 = arith.constant 0 : index
    %0 = vector.load %arg1[%c0, %c0_0] : memref<128x24xbf16, #tpu.memory_space<vmem>>, vector<128x24xbf16>
    %c0_1 = arith.constant 0 : index
    %c0_2 = arith.constant 0 : index
    %1 = vector.load %arg2[%c0_1, %c0_2] : memref<24x64xbf16, #tpu.memory_space<vmem>>, vector<24x64xbf16>
    %cst = arith.constant dense<0.000000e+00> : vector<128x64xf32>
    %2 = tpu.matmul %0, %1, %cst {dimension_numbers = #tpu.dot_dimension_numbers<[1], [0], [0], [1], [0, 0, 1, 1], [], []>} : vector<128x24xbf16>, vector<24x64xbf16>, vector<128x64xf32> -> vector<128x64xf32>
    %c0_3 = arith.constant 0 : index
    %c0_4 = arith.constant 0 : index
    %3 = vector.load %arg3[%c0_3, %c0_4] : memref<1x64xf32, #tpu.memory_space<vmem>>, vector<1x64xf32>
    %4 = vector.broadcast %3 : vector<1x64xf32> to vector<128x64xf32>
    %5 = arith.addf %2, %4 : vector<128x64xf32>
    %cst_5 = arith.constant 0.000000e+00 : f32
    %6 = vector.broadcast %cst_5 : f32 to vector<128x64xf32>
    %7 = arith.maximumf %5, %6 : vector<128x64xf32>
    %8 = arith.truncf %7 : vector<128x64xf32> to vector<128x64xbf16>
    %c0_6 = arith.constant 0 : index
    %c0_7 = arith.constant 0 : index
    %9 = vector.load %arg4[%c0_6, %c0_7] : memref<64x64xbf16, #tpu.memory_space<vmem>>, vector<64x64xbf16>
    %cst_8 = arith.constant dense<0.000000e+00> : vector<128x64xf32>
    %10 = tpu.matmul %8, %9, %cst_8 {dimension_numbers = #tpu.dot_dimension_numbers<[1], [0], [0], [1], [0, 0, 1, 1], [], []>} : vector<128x64xbf16>, vector<64x64xbf16>, vector<128x64xf32> -> vector<128x64xf32>
    %c0_9 = arith.constant 0 : index
    %c0_10 = arith.constant 0 : index
    %11 = vector.load %arg5[%c0_9, %c0_10] : memref<1x64xf32, #tpu.memory_space<vmem>>, vector<1x64xf32>
    %12 = vector.broadcast %11 : vector<1x64xf32> to vector<128x64xf32>
    %13 = arith.addf %10, %12 : vector<128x64xf32>
    %cst_11 = arith.constant 0.000000e+00 : f32
    %14 = vector.broadcast %cst_11 : f32 to vector<128x64xf32>
    %15 = arith.maximumf %13, %14 : vector<128x64xf32>
    %c0_12 = arith.constant 0 : index
    %c0_13 = arith.constant 0 : index
    %16 = vector.load %arg6[%c0_12, %c0_13] : memref<1x64xf32, #tpu.memory_space<vmem>>, vector<1x64xf32>
    %17 = vector.broadcast %16 : vector<1x64xf32> to vector<128x64xf32>
    %18 = arith.mulf %15, %17 : vector<128x64xf32>
    %19 = vector.shape_cast %18 : vector<128x64xf32> to vector<1x128x64xf32>
    %cst_14 = arith.constant dense<0.000000e+00> : vector<1x128xf32>
    %20 = vector.multi_reduction <add>, %19, %cst_14 [2] : vector<1x128x64xf32> to vector<1x128xf32>
    %c0_15 = arith.constant 0 : index
    %c0_16 = arith.constant 0 : index
    %21 = memref.load %arg7[%c0_15, %c0_16] : memref<1x1xf32, #tpu.memory_space<smem>>
    %22 = vector.broadcast %21 : f32 to vector<1x128xf32>
    %23 = arith.addf %20, %22 : vector<1x128xf32>
    %c0_17 = arith.constant 0 : index
    %c0_18 = arith.constant 0 : index
    %24 = vector.load %arg8[%c0_17, %c0_18] : memref<1x128xf32, #tpu.memory_space<vmem>>, vector<1x128xf32>
    tpu.vector_store %arg8[%c0_17, %c0_18], %23 {strides = array<i32>} : memref<1x128xf32, #tpu.memory_space<vmem>>, vector<1x128xf32>,
    return
  }
  func.func @transform_0(%arg0: i32) -> (i32, i32) {
    %c0_i32 = arith.constant 0 : i32
    %c0_i32_0 = arith.constant 0 : i32
    return %arg0, %c0_i32 : i32, i32
  }
  func.func @transform_1(%arg0: i32) -> (i32, i32) {
    %c0_i32 = arith.constant 0 : i32
    %c0_i32_0 = arith.constant 0 : i32
    %c0_i32_1 = arith.constant 0 : i32
    return %c0_i32, %c0_i32_0 : i32, i32
  }
  func.func @transform_2(%arg0: i32) -> (i32, i32) {
    %c0_i32 = arith.constant 0 : i32
    %c0_i32_0 = arith.constant 0 : i32
    %c0_i32_1 = arith.constant 0 : i32
    return %c0_i32, %c0_i32_0 : i32, i32
  }
  func.func @transform_3(%arg0: i32) -> (i32, i32) {
    %c0_i32 = arith.constant 0 : i32
    %c0_i32_0 = arith.constant 0 : i32
    %c0_i32_1 = arith.constant 0 : i32
    return %c0_i32, %c0_i32_0 : i32, i32
  }
  func.func @transform_4(%arg0: i32) -> (i32, i32) {
    %c0_i32 = arith.constant 0 : i32
    %c0_i32_0 = arith.constant 0 : i32
    %c0_i32_1 = arith.constant 0 : i32
    return %c0_i32, %c0_i32_0 : i32, i32
  }
  func.func @transform_5(%arg0: i32) -> (i32, i32) {
    %c0_i32 = arith.constant 0 : i32
    %c0_i32_0 = arith.constant 0 : i32
    %c0_i32_1 = arith.constant 0 : i32
    return %c0_i32, %c0_i32_0 : i32, i32
  }
  func.func @transform_6(%arg0: i32) -> (i32, i32) {
    %c0_i32 = arith.constant 0 : i32
    %c0_i32_0 = arith.constant 0 : i32
    %c0_i32_1 = arith.constant 0 : i32
    return %c0_i32, %c0_i32_0 : i32, i32
  }
  func.func @transform_7(%arg0: i32) -> (i32, i32) {
    %c0_i32 = arith.constant 0 : i32
    %c0_i32_0 = arith.constant 0 : i32
    return %arg0, %c0_i32 : i32, i32
  }
}

</mosaic_0001>

<llo_original>
// kernel: tpu_custom_call.1
$region0: #{tpu_custom_call.1}
  #allocation0 [shape = 'u32[]', space=smem, size = 0x4, offset = 0x4, fixed_abs, tag = 'smem constant byte address 0x4 - core index']
  #allocation1 [shape = 'u32[72,128]{1,0:T(1,128)}', space=vmem, size = 0x9000, scoped, tag = 'internal scratch']
  #allocation2 [shape = 'f32[1,1]{1,0:T(1,128)S(6)}', space=smem, size = 0x200, scoped, tag = 'scoped memory for tpu_custom_call.1']
  %s0 = inlined_call_operand.vmem [shape: bf16[128,24], index: 0, kind: input, shape index: {}]
  %s1 = inlined_call_operand.vmem [shape: bf16[24,64], index: 1, kind: input, shape index: {}]
  %s2 = inlined_call_operand.vmem [shape: f32[1,64], index: 2, kind: input, shape index: {}]
  %s3 = inlined_call_operand.vmem [shape: bf16[64,64], index: 3, kind: input, shape index: {}]
  %s4 = inlined_call_operand.vmem [shape: f32[1,64], index: 4, kind: input, shape index: {}]
  %s5 = inlined_call_operand.vmem [shape: f32[1,64], index: 5, kind: input, shape index: {}]
  %s6 = inlined_call_operand.<no memory space> [shape: f32[1,1], index: 6, kind: input, shape index: {}]
  %s7 = inlined_call_operand.hbm [shape: f32[1,128], index: 7, kind: output, shape index: {}]
  %s8 = sld [smem:[#allocation0]]
  $region38: #{tpu_custom_call.1} parent=0
    _
  %s10 = ssub.s32 1, %s8
  %s11 = scalar_select 0, %s10, %s8
  %12 = sst [smem:[#allocation2]] %s6
  $region1: #{tpu_custom_call.1} parent=0
    #allocation3 [shape = 'u8[512]{0}', space=vmem, size = 0x400, scoped, tag = 'output window, operand 0, single buffered']
    #allocation4 [shape = 's32[1]{0}', space=sflag, size = 0x4, scoped, tag = 'scoped memory for tpu_custom_call.1']
    %13 = vsyncpa [#allocation4], 0
    // Predicated region
    $region2: #{tpu_custom_call.1} parent=1 // pred_check
      _
    $region3: #{tpu_custom_call.1} parent=1 // pred_check_branch
      %15 = sbr.rel (0) target = $region5
    $region4: #{tpu_custom_call.1} parent=1 // pred_region
      _
    $region5: #{tpu_custom_call.1} parent=1 // pred_fallthru
      _
    // Predicated region
    $region6: #{tpu_custom_call.1} parent=1 // pred_check
      _
    $region7: #{tpu_custom_call.1} parent=1 // pred_check_branch
      %17 = sbr.rel (0) target = $region9
    $region8: #{tpu_custom_call.1} parent=1 // pred_region
      _
    $region9: #{tpu_custom_call.1} parent=1 // pred_fallthru
      _
    // Predicated region
    $region10: #{tpu_custom_call.1} parent=1 // pred_check
      _
    $region11: #{tpu_custom_call.1} parent=1 // pred_check_branch
      %19 = sbr.rel (0) target = $region13
    $region12: #{tpu_custom_call.1} parent=1 // pred_region
      _
    $region13: #{tpu_custom_call.1} parent=1 // pred_fallthru
      _
    // Predicated region
    $region14: #{tpu_custom_call.1} parent=1 // pred_check
      _
    $region15: #{tpu_custom_call.1} parent=1 // pred_check_branch
      %21 = sbr.rel (0) target = $region17
    $region16: #{tpu_custom_call.1} parent=1 // pred_region
      _
    $region17: #{tpu_custom_call.1} parent=1 // pred_fallthru
      _
    // Predicated region
    $region18: #{tpu_custom_call.1} parent=1 // pred_check
      _
    $region19: #{tpu_custom_call.1} parent=1 // pred_check_branch
      %23 = sbr.rel (0) target = $region21
    $region20: #{tpu_custom_call.1} parent=1 // pred_region
      _
    $region21: #{tpu_custom_call.1} parent=1 // pred_fallthru
      _
    // Predicated region
    $region22: #{tpu_custom_call.1} parent=1 // pred_check
      _
    $region23: #{tpu_custom_call.1} parent=1 // pred_check_branch
      %25 = sbr.rel (0) target = $region25
    $region24: #{tpu_custom_call.1} parent=1 // pred_region
      _
    $region25: #{tpu_custom_call.1} parent=1 // pred_fallthru
      _
    // Predicated region
    $region26: #{tpu_custom_call.1} parent=1 // pred_check
      _
    $region27: #{tpu_custom_call.1} parent=1 // pred_check_branch
      %27 = sbr.rel (0) target = $region29
    $region28: #{tpu_custom_call.1} parent=1 // pred_region
      _
    $region29: #{tpu_custom_call.1} parent=1 // pred_fallthru
      _
    %v29 = vld [vmem:[%s0] sm:$0xf]
    %v30 = vld [vmem:[%s0 + $0x4] sm:$0xf]
    %v31 = vld [vmem:[%s0 + $0x8] sm:$0xf]
    %v32 = vld [vmem:[%s0 + $0xc] sm:$0xf]
    %v33 = vld [vmem:[%s0 + $0x10] sm:$0xf]
    %v34 = vld [vmem:[%s0 + $0x14] sm:$0xf]
    %v35 = vld [vmem:[%s0 + $0x18] sm:$0xf]
    %v36 = vld [vmem:[%s0 + $0x1c] sm:$0xf]
    %v37 = vld [vmem:[%s0 + $0x20] sm:$0xf]
    %v38 = vld [vmem:[%s0 + $0x24] sm:$0xf]
    %v39 = vld [vmem:[%s0 + $0x28] sm:$0xf]
    %v40 = vld [vmem:[%s0 + $0x2c] sm:$0xf]
    %v41 = vld [vmem:[%s0 + $0x30] sm:$0xf]
    %v42 = vld [vmem:[%s0 + $0x34] sm:$0xf]
    %v43 = vld [vmem:[%s0 + $0x38] sm:$0xf]
    %v44 = vld [vmem:[%s0 + $0x3c] sm:$0xf]
    %v45 = vld [vmem:[%s1] sm:$0xf]
    %v46 = vld [vmem:[%s1 + $0x4] sm:$0xf]
    %v47 = vld [vmem:[%s1 + $0x8] sm:$0xf]
    %v48 = vld [vmem:[%s2] sm:$0x1]
    %v50 = vperm.slane %v48, 0
    %v68 = vunpack.c.l.b16 %v29
    %v69 = vunpack.c.l.b16 %v30
    %v70 = vunpack.c.l.b16 %v31
    %v71 = vunpack.c.l.b16 %v32
    %v72 = vunpack.c.l.b16 %v33
    %v73 = vunpack.c.l.b16 %v34
    %v74 = vunpack.c.l.b16 %v35
    %v75 = vunpack.c.l.b16 %v36
    %v76 = vunpack.c.l.b16 %v37
    %v77 = vunpack.c.l.b16 %v38
    %v78 = vunpack.c.l.b16 %v39
    %v79 = vunpack.c.l.b16 %v40
    %v80 = vunpack.c.l.b16 %v41
    %v81 = vunpack.c.l.b16 %v42
    %v82 = vunpack.c.l.b16 %v43
    %v83 = vunpack.c.l.b16 %v44
    %v84 = vpack.c.b16 %v69, %v68
    %v85 = vpack.c.b16 %v71, %v70
    %v86 = vpack.c.b16 %v73, %v72
    %v87 = vpack.c.b16 %v75, %v74
    %v88 = vpack.c.b16 %v77, %v76
    %v89 = vpack.c.b16 %v79, %v78
    %v90 = vpack.c.b16 %v81, %v80
    %v91 = vpack.c.b16 %v83, %v82
    %v95 = vunpack.c.l.b16 %v45
    %v96 = vunpack.c.l.b16 %v46
    %v97 = vunpack.c.l.b16 %v47
    %v98 = vpack.c.b16 %v96, %v95
    %v99 = vpack.c.b16 %v97, %v97
    %vm101 = vcmask 195584
    %v103 = vsel %vm101, %v84, 0
    %v106 = vsel %vm101, %v85, 0
    %v109 = vsel %vm101, %v86, 0
    %v112 = vsel %vm101, %v87, 0
    %v115 = vsel %vm101, %v88, 0
    %v118 = vsel %vm101, %v89, 0
    %v121 = vsel %vm101, %v90, 0
    %v124 = vsel %vm101, %v91, 0
    %vm126 = vcmask 1043456
    %v128 = vsel %vm126, %v99, 0
    %130 = vmatpush.bf16.msra.mxu0 0
    %131 = vmatpush.bf16.msra.mxu0 0
    %132 = vmatpush.bf16.msra.mxu0 0
    %133 = vmatpush.bf16.msra.mxu0 0
    %134 = vmatpush.bf16.msra.mxu0 0
    %135 = vmatpush.bf16.msra.mxu0 0
    %136 = vmatpush.bf16.msra.mxu0 %v128
    %137 = vmatpush.bf16.msra.mxu0 %v98
    %138 = vmatmul.bf16.gmra.mxu0 %v103
    %v139 = vpop.f32.mrf.mxu0
    %v140 = vadd.f32 %v50, %v139
    %v141 = vpop.f32.mrf.mxu0
    %v142 = vadd.f32 %v50, %v141
    %143 = vmatmul.bf16.gmra.mxu0 %v106
    %v144 = vpop.f32.mrf.mxu0
    %v145 = vadd.f32 %v50, %v144
    %v146 = vpop.f32.mrf.mxu0
    %v147 = vadd.f32 %v50, %v146
    %148 = vmatmul.bf16.gmra.mxu0 %v109
    %v149 = vpop.f32.mrf.mxu0
    %v150 = vadd.f32 %v50, %v149
    %v151 = vpop.f32.mrf.mxu0
    %v152 = vadd.f32 %v50, %v151
    %153 = vmatmul.bf16.gmra.mxu0 %v112
    %v154 = vpop.f32.mrf.mxu0
    %v155 = vadd.f32 %v50, %v154
    %v156 = vpop.f32.mrf.mxu0
    %v157 = vadd.f32 %v50, %v156
    %158 = vmatmul.bf16.gmra.mxu0 %v115
    %v159 = vpop.f32.mrf.mxu0
    %v160 = vadd.f32 %v50, %v159
    %v161 = vpop.f32.mrf.mxu0
    %v162 = vadd.f32 %v50, %v161
    %163 = vmatmul.bf16.gmra.mxu0 %v118
    %v164 = vpop.f32.mrf.mxu0
    %v165 = vadd.f32 %v50, %v164
    %v166 = vpop.f32.mrf.mxu0
    %v167 = vadd.f32 %v50, %v166
    %168 = vmatmul.bf16.gmra.mxu0 %v121
    %v169 = vpop.f32.mrf.mxu0
    %v170 = vadd.f32 %v50, %v169
    %v171 = vpop.f32.mrf.mxu0
    %v172 = vadd.f32 %v50, %v171
    %173 = vmatmul.bf16.gmra.mxu0 %v124
    %v174 = vpop.f32.mrf.mxu0
    %v175 = vadd.f32 %v50, %v174
    %v176 = vpop.f32.mrf.mxu0
    %v177 = vadd.f32 %v50, %v176
    %178 = vdwg.mxu0
    %v179 = vmax.f32 %v140, 0.0
    %v180 = vmax.f32 %v142, 0.0
    %v181 = vmax.f32 %v145, 0.0
    %v182 = vmax.f32 %v147, 0.0
    %v183 = vmax.f32 %v150, 0.0
    %v184 = vmax.f32 %v152, 0.0
    %v185 = vmax.f32 %v155, 0.0
    %v186 = vmax.f32 %v157, 0.0
    %v187 = vmax.f32 %v160, 0.0
    %v188 = vmax.f32 %v162, 0.0
    %v189 = vmax.f32 %v165, 0.0
    %v190 = vmax.f32 %v167, 0.0
    %v191 = vmax.f32 %v170, 0.0
    %v192 = vmax.f32 %v172, 0.0
    %v193 = vmax.f32 %v175, 0.0
    %v194 = vmax.f32 %v177, 0.0
    %v195 = vpack.c.bf16 %v180, %v179
    %v196 = vpack.c.bf16 %v182, %v181
    %v197 = vpack.c.bf16 %v184, %v183
    %v198 = vpack.c.bf16 %v186, %v185
    %v199 = vpack.c.bf16 %v188, %v187
    %v200 = vpack.c.bf16 %v190, %v189
    %v201 = vpack.c.bf16 %v192, %v191
    %v202 = vpack.c.bf16 %v194, %v193
    %v203 = vld [vmem:[%s3] sm:$0xf]
    %v204 = vld [vmem:[%s3 + $0x4] sm:$0xf]
    %v205 = vld [vmem:[%s3 + $0x8] sm:$0xf]
    %v206 = vld [vmem:[%s3 + $0xc] sm:$0xf]
    %v207 = vld [vmem:[%s3 + $0x10] sm:$0xf]
    %v208 = vld [vmem:[%s3 + $0x14] sm:$0xf]
    %v209 = vld [vmem:[%s3 + $0x18] sm:$0xf]
    %v210 = vld [vmem:[%s3 + $0x1c] sm:$0xf]
    %v211 = vld [vmem:[%s4] sm:$0x1]
    %v213 = vperm.slane %v211, 0
    %v223 = vunpack.c.l.b16 %v203
    %v224 = vunpack.c.l.b16 %v204
    %v225 = vunpack.c.l.b16 %v205
    %v226 = vunpack.c.l.b16 %v206
    %v227 = vunpack.c.l.b16 %v207
    %v228 = vunpack.c.l.b16 %v208
    %v229 = vunpack.c.l.b16 %v209
    %v230 = vunpack.c.l.b16 %v210
    %v231 = vpack.c.b16 %v224, %v223
    %v232 = vpack.c.b16 %v226, %v225
    %v233 = vpack.c.b16 %v228, %v227
    %v234 = vpack.c.b16 %v230, %v229
    %vm239 = vcmask 523264
    %v241 = vsel %vm239, %v195, 0
    %v244 = vsel %vm239, %v196, 0
    %v247 = vsel %vm239, %v197, 0
    %v250 = vsel %vm239, %v198, 0
    %v253 = vsel %vm239, %v199, 0
    %v256 = vsel %vm239, %v200, 0
    %v259 = vsel %vm239, %v201, 0
    %v262 = vsel %vm239, %v202, 0
    %264 = vmatpush.bf16.msra.mxu0 0
    %265 = vmatpush.bf16.msra.mxu0 0
    %266 = vmatpush.bf16.msra.mxu0 0
    %267 = vmatpush.bf16.msra.mxu0 0
    %268 = vmatpush.bf16.msra.mxu0 %v234
    %269 = vmatpush.bf16.msra.mxu0 %v233
    %270 = vmatpush.bf16.msra.mxu0 %v232
    %271 = vmatpush.bf16.msra.mxu0 %v231
    %272 = vmatmul.bf16.gmra.mxu0 %v241
    %v273 = vpop.f32.mrf.mxu0
    %v274 = vadd.f32 %v213, %v273
    %v275 = vpop.f32.mrf.mxu0
    %v276 = vadd.f32 %v213, %v275
    %277 = vmatmul.bf16.gmra.mxu0 %v244
    %v278 = vpop.f32.mrf.mxu0
    %v279 = vadd.f32 %v213, %v278
    %v280 = vpop.f32.mrf.mxu0
    %v281 = vadd.f32 %v213, %v280
    %282 = vmatmul.bf16.gmra.mxu0 %v247
    %v283 = vpop.f32.mrf.mxu0
    %v284 = vadd.f32 %v213, %v283
    %v285 = vpop.f32.mrf.mxu0
    %v286 = vadd.f32 %v213, %v285
    %287 = vmatmul.bf16.gmra.mxu0 %v250
    %v288 = vpop.f32.mrf.mxu0
    %v289 = vadd.f32 %v213, %v288
    %v290 = vpop.f32.mrf.mxu0
    %v291 = vadd.f32 %v213, %v290
    %292 = vmatmul.bf16.gmra.mxu0 %v253
    %v293 = vpop.f32.mrf.mxu0
    %v294 = vadd.f32 %v213, %v293
    %v295 = vpop.f32.mrf.mxu0
    %v296 = vadd.f32 %v213, %v295
    %297 = vmatmul.bf16.gmra.mxu0 %v256
    %v298 = vpop.f32.mrf.mxu0
    %v299 = vadd.f32 %v213, %v298
    %v300 = vpop.f32.mrf.mxu0
    %v301 = vadd.f32 %v213, %v300
    %302 = vmatmul.bf16.gmra.mxu0 %v259
    %v303 = vpop.f32.mrf.mxu0
    %v304 = vadd.f32 %v213, %v303
    %v305 = vpop.f32.mrf.mxu0
    %v306 = vadd.f32 %v213, %v305
    %307 = vmatmul.bf16.gmra.mxu0 %v262
    %v308 = vpop.f32.mrf.mxu0
    %v309 = vadd.f32 %v213, %v308
    %v310 = vpop.f32.mrf.mxu0
    %v311 = vadd.f32 %v213, %v310
    %312 = vdwg.mxu0
    %v313 = vmax.f32 %v274, 0.0
    %v314 = vmax.f32 %v276, 0.0
    %v315 = vmax.f32 %v279, 0.0
    %v316 = vmax.f32 %v281, 0.0
    %v317 = vmax.f32 %v284, 0.0
    %v318 = vmax.f32 %v286, 0.0
    %v319 = vmax.f32 %v289, 0.0
    %v320 = vmax.f32 %v291, 0.0
    %v321 = vmax.f32 %v294, 0.0
    %v322 = vmax.f32 %v296, 0.0
    %v323 = vmax.f32 %v299, 0.0
    %v324 = vmax.f32 %v301, 0.0
    %v325 = vmax.f32 %v304, 0.0
    %v326 = vmax.f32 %v306, 0.0
    %v327 = vmax.f32 %v309, 0.0
    %v328 = vmax.f32 %v311, 0.0
    %v329 = vld [vmem:[%s5] sm:$0x1]
    %v331 = vperm.slane %v329, 0
    %v333 = vmul.f32 %v313, %v331
    %v334 = vmul.f32 %v314, %v331
    %v335 = vmul.f32 %v315, %v331
    %v336 = vmul.f32 %v316, %v331
    %v337 = vmul.f32 %v317, %v331
    %v338 = vmul.f32 %v318, %v331
    %v339 = vmul.f32 %v319, %v331
    %v340 = vmul.f32 %v320, %v331
    %v341 = vmul.f32 %v321, %v331
    %v342 = vmul.f32 %v322, %v331
    %v343 = vmul.f32 %v323, %v331
    %v344 = vmul.f32 %v324, %v331
    %v345 = vmul.f32 %v325, %v331
    %v346 = vmul.f32 %v326, %v331
    %v347 = vmul.f32 %v327, %v331
    %v348 = vmul.f32 %v328, %v331
    %v349 = vsel %vm239, %v333, 0.0
    %350 = vadd.xlane.f32.xlu0 %v349
    %v351 = vpop.xlane.xlu0 %350
    %v352 = vsel %vm239, %v334, 0.0
    %353 = vadd.xlane.f32.xlu0 %v352
    %v354 = vpop.xlane.xlu0 %353
    %v355 = vsel %vm239, %v335, 0.0
    %356 = vadd.xlane.f32.xlu0 %v355
    %v357 = vpop.xlane.xlu0 %356
    %v358 = vsel %vm239, %v336, 0.0
    %359 = vadd.xlane.f32.xlu0 %v358
    %v360 = vpop.xlane.xlu0 %359
    %v361 = vsel %vm239, %v337, 0.0
    %362 = vadd.xlane.f32.xlu0 %v361
    %v363 = vpop.xlane.xlu0 %362
    %v364 = vsel %vm239, %v338, 0.0
    %365 = vadd.xlane.f32.xlu0 %v364
    %v366 = vpop.xlane.xlu0 %365
    %v367 = vsel %vm239, %v339, 0.0
    %368 = vadd.xlane.f32.xlu0 %v367
    %v369 = vpop.xlane.xlu0 %368
    %v370 = vsel %vm239, %v340, 0.0
    %371 = vadd.xlane.f32.xlu0 %v370
    %v372 = vpop.xlane.xlu0 %371
    %v373 = vsel %vm239, %v341, 0.0
    %374 = vadd.xlane.f32.xlu0 %v373
    %v375 = vpop.xlane.xlu0 %374
    %v376 = vsel %vm239, %v342, 0.0
    %377 = vadd.xlane.f32.xlu0 %v376
    %v378 = vpop.xlane.xlu0 %377
    %v379 = vsel %vm239, %v343, 0.0
    %380 = vadd.xlane.f32.xlu0 %v379
    %v381 = vpop.xlane.xlu0 %380
    %v382 = vsel %vm239, %v344, 0.0
    %383 = vadd.xlane.f32.xlu0 %v382
    %v384 = vpop.xlane.xlu0 %383
    %v385 = vsel %vm239, %v345, 0.0
    %386 = vadd.xlane.f32.xlu0 %v385
    %v387 = vpop.xlane.xlu0 %386
    %v388 = vsel %vm239, %v346, 0.0
    %389 = vadd.xlane.f32.xlu0 %v388
    %v390 = vpop.xlane.xlu0 %389
    %v391 = vsel %vm239, %v347, 0.0
    %392 = vadd.xlane.f32.xlu0 %v391
    %v393 = vpop.xlane.xlu0 %392
    %v394 = vsel %vm239, %v348, 0.0
    %395 = vadd.xlane.f32.xlu0 %v394
    %v396 = vpop.xlane.xlu0 %395
    %s397 = sld [smem:[#allocation2]]
    %v398 = vstv %s397
    %v399 = vadd.f32 %v351, %v398
    %v400 = vadd.f32 %v354, %v398
    %v401 = vadd.f32 %v357, %v398
    %v402 = vadd.f32 %v360, %v398
    %v403 = vadd.f32 %v363, %v398
    %v404 = vadd.f32 %v366, %v398
    %v405 = vadd.f32 %v369, %v398
    %v406 = vadd.f32 %v372, %v398
    %v407 = vadd.f32 %v375, %v398
    %v408 = vadd.f32 %v378, %v398
    %v409 = vadd.f32 %v381, %v398
    %v410 = vadd.f32 %v384, %v398
    %v411 = vadd.f32 %v387, %v398
    %v412 = vadd.f32 %v390, %v398
    %v413 = vadd.f32 %v393, %v398
    %v414 = vadd.f32 %v396, %v398
    %v431 = vlaneseq
    %v432 = vand.u32 %v431, 127
    %v433 = vperm.slane %v399, %v432
    %v434 = vadd.s32 %v432, 4294967288
    %v435 = vperm.slane %v400, %v434
    %vm436 = vcmask 130112
    %v437 = vsel %vm436, %v435, %v433
    %v438 = vadd.s32 %v432, 4294967280
    %v439 = vperm.slane %v401, %v438
    %vm440 = vcmask 195712
    %v441 = vsel %vm440, %v439, %v437
    %v442 = vadd.s32 %v432, 4294967272
    %v443 = vperm.slane %v402, %v442
    %vm444 = vcmask 261312
    %v445 = vsel %vm444, %v443, %v441
    %v446 = vadd.s32 %v432, 4294967264
    %v447 = vperm.slane %v403, %v446
    %vm448 = vcmask 326912
    %v449 = vsel %vm448, %v447, %v445
    %v450 = vadd.s32 %v432, 4294967256
    %v451 = vperm.slane %v404, %v450
    %vm452 = vcmask 392512
    %v453 = vsel %vm452, %v451, %v449
    %v454 = vadd.s32 %v432, 4294967248
    %v455 = vperm.slane %v405, %v454
    %vm456 = vcmask 458112
    %v457 = vsel %vm456, %v455, %v453
    %v458 = vadd.s32 %v432, 4294967240
    %v459 = vperm.slane %v406, %v458
    %vm460 = vcmask 523712
    %v461 = vsel %vm460, %v459, %v457
    %v462 = vadd.s32 %v432, 4294967232
    %v463 = vperm.slane %v407, %v462
    %vm464 = vcmask 589312
    %v465 = vsel %vm464, %v463, %v461
    %v466 = vadd.s32 %v432, 4294967224
    %v467 = vperm.slane %v408, %v466
    %vm468 = vcmask 654912
    %v469 = vsel %vm468, %v467, %v465
    %v470 = vadd.s32 %v432, 4294967216
    %v471 = vperm.slane %v409, %v470
    %vm472 = vcmask 720512
    %v473 = vsel %vm472, %v471, %v469
    %v474 = vadd.s32 %v432, 4294967208
    %v475 = vperm.slane %v410, %v474
    %vm476 = vcmask 786112
    %v477 = vsel %vm476, %v475, %v473
    %v478 = vadd.s32 %v432, 4294967200
    %v479 = vperm.slane %v411, %v478
    %vm480 = vcmask 851712
    %v481 = vsel %vm480, %v479, %v477
    %v482 = vadd.s32 %v432, 4294967192
    %v483 = vperm.slane %v412, %v482
    %vm484 = vcmask 917312
    %v485 = vsel %vm484, %v483, %v481
    %v486 = vadd.s32 %v432, 4294967184
    %v487 = vperm.slane %v413, %v486
    %vm488 = vcmask 982912
    %v489 = vsel %vm488, %v487, %v485
    %v490 = vadd.s32 %v432, 4294967176
    %v491 = vperm.slane %v414, %v490
    %vm492 = vcmask 1048512
    %v493 = vsel %vm492, %v491, %v489
    %495 = vst [vmem:[#allocation3] sm:$0x1] %v493
    // Predicated region
    $region30: #{tpu_custom_call.1} parent=1 // pred_check
      _
    $region31: #{tpu_custom_call.1} parent=1 // pred_check_branch
      %497 = sbr.rel (0) target = $region33
    $region32: #{tpu_custom_call.1} parent=1 // pred_region
      %499 = vsyncadd [#allocation4], 0
      %s501 = sshll.u32 [#allocation3], 4
      %s502 = int_to_ptr.vmem [resolvable:$true] %s501
      %s503 = sshll.u32 %s7, 4
      %s504 = int_to_ptr.hbm [resolvable:$true] %s503
      %506 = dma.vmem_to_hbm [thread:$0]  %s502, 16, %s504, [#allocation4]
    $region33: #{tpu_custom_call.1} parent=1 // pred_fallthru
      _
    // Predicated region
    $region34: #{tpu_custom_call.1} parent=1 // pred_check
      _
    $region35: #{tpu_custom_call.1} parent=1 // pred_check_branch
      %508 = sbr.rel (0) target = $region37
    $region36: #{tpu_custom_call.1} parent=1 // pred_region
      %510 = dma.done [#allocation4], 16
    $region37: #{tpu_custom_call.1} parent=1 // pred_fallthru
      _
    %511 = vsyncpa [#allocation4], 1

</llo_original>
